<compile_context>
chip_gen: v7x
topology: tpu7x:2x2x1
jax: 0.10.0
libtpu: 0.0.40
codegen_flags: <defaults>
</compile_context>

<pallas_src>
import jax
import jax.numpy as jnp
from jax.experimental import pallas as pl
from jax.experimental.pallas import tpu as pltpu

_LANE = 128
_SUBLANE = 8


# ----------------------------------------------------------------------------
# Kernels
# ----------------------------------------------------------------------------
def _pwconv_mxu_kernel(x_ref, w_ref, b_ref, o_ref):
    # x_ref: (Cin, THW)   pixels in lanes (lane-dense, unmasked stores)
    # w_ref: (TN,  Cin)   output-channel tile of the 1x1 weight
    # b_ref: (TN,  1)     bias column (broadcast along lanes)
    # o_ref: (TN,  THW)
    acc = jnp.dot(w_ref[...], x_ref[...], preferred_element_type=jnp.float32)
    o_ref[...] = (acc + b_ref[...].astype(jnp.float32)).astype(o_ref.dtype)


def _pwconv_vpu_kernel(x_ref, w_ref, b_ref, o_ref):
    # Tiny Cin AND tiny Cout tile: unrolled broadcast-FMA on the VPU; the op is
    # HBM-bound here and an MXU matmul would be <1% utilized.
    x = x_ref[...].astype(jnp.float32)          # (Cin, THW)
    w = w_ref[...].astype(jnp.float32)          # (TN,  Cin)
    acc = jnp.broadcast_to(b_ref[...].astype(jnp.float32), o_ref.shape)
    cin = x_ref.shape[0]
    for c in range(cin):                        # static unroll, Cin <= 8
        acc = acc + w[:, c:c + 1] * x[c:c + 1, :]
    o_ref[...] = acc.astype(o_ref.dtype)


# ----------------------------------------------------------------------------
# Tile / VMEM selection
# ----------------------------------------------------------------------------
def _round_up(v, m):
    return (v + m - 1) // m * m


def _vmem_sizes():
    """Return (pipelined-buffer budget, vmem_limit_bytes), generation aware."""
    cap = None
    try:
        info = pltpu.get_tpu_info()
        cap = getattr(info, "vmem_capacity_bytes", None)
    except Exception:
        cap = None
    if cap is None:
        cap = 64 * 1024 * 1024          # conservative: assume v7x-sized VMEM
    if cap >= 96 * 1024 * 1024:         # v5e / v6e: 128 MiB physical VMEM
        return 48 * 1024 * 1024, 64 * 1024 * 1024
    # v7x: 64 MiB per TensorCore — keep headroom for compiler scratch.
    return 36 * 1024 * 1024, 48 * 1024 * 1024


def _pick_cout_tile(cout):
    if cout <= 256:
        return cout                     # full extent — always a legal block
    if cout % 256 == 0:
        return 256
    if cout % 128 == 0:
        return 128
    return 256                          # partial last Cout block, masked on store


def _pick_hw_tile(hw, cin, tn, itemsize, budget, want_split):
    if hw <= _LANE:
        return hw                       # full extent — always legal
    tn_pad = _round_up(tn, _SUBLANE)
    cin_lanes = _round_up(cin, _LANE)
    # Small double-buffered blocks, lane/sublane padded (weight + bias).
    fixed = 2 * tn_pad * cin_lanes * itemsize
    fixed += 2 * tn_pad * _LANE * itemsize
    # Bytes per lane of THW:
    per_hw = 2 * cin * itemsize         # x block, double-buffered
    per_hw += 2 * tn * itemsize         # out block, double-buffered
    per_hw += tn * 4                    # f32 accumulator temporary
    per_hw += cin * 4                   # f32 x copy (VPU path) / staging slack
    avail = budget - fixed
    if avail <= per_hw * _LANE:
        return _LANE
    max_thw = avail // per_hw
    if max_thw >= hw and not want_split:
        return hw                       # whole (Cin, hw) slab: one contiguous DMA
    thw = max(_LANE, (min(max_thw, hw) // _LANE) * _LANE)
    if want_split:
        # Expose >= 2 HW tiles so both v7x TensorCores get work.
        thw = min(thw, _round_up(pl.cdiv(hw, 2), _LANE))
    return int(thw)


# ----------------------------------------------------------------------------
# Public wrapper
# ----------------------------------------------------------------------------
def pointwise_conv2d(x_nchw, weight, bias=None):
    """1x1 conv, stride 1, no padding, groups=1 (PyTorch Conv2d semantics).

    x_nchw : (N, Cin, H, W)
    weight : (Cout, Cin, 1, 1)   (PyTorch Conv2d weight layout)
    bias   : (Cout,) or None
    returns: (N, Cout, H, W)
    """
    n, cin, h, w = x_nchw.shape
    cout = weight.shape[0]
    hw = h * w
    dtype = x_nchw.dtype
    itemsize = jnp.dtype(dtype).itemsize

    x_flat = x_nchw.reshape(n, cin, hw)                 # contiguous view, no copy
    w_mat = weight.reshape(cout, cin).astype(dtype)     # (Cout, Cin)
    if bias is None:
        bias = jnp.zeros((cout,), dtype)
    b_col = bias.reshape(cout, 1).astype(dtype)         # (Cout, 1)

    budget, vmem_limit = _vmem_sizes()
    tn = _pick_cout_tile(cout)
    n_cout_tiles = pl.cdiv(cout, tn)
    # With a single batch and a single Cout tile, split HW so a parallel axis of
    # extent >= 2 exists for megacore (v7x); harmless elsewhere.
    want_split = (n == 1 and n_cout_tiles == 1 and hw >= 512)
    thw = _pick_hw_tile(hw, cin, tn, itemsize, budget, want_split)
    n_hw_tiles = pl.cdiv(hw, thw)

    # Grid: HW tiles leading (megacore-shardable), batch middle, Cout tiles
    # INNERMOST so the x block index is constant across the inner loop — the
    # activation tile stays resident in VMEM and x is read from HBM once.
    grid = (n_hw_tiles, n, n_cout_tiles)

    kernel = _pwconv_vpu_kernel if (cin <= 8 and tn <= 32) else _pwconv_mxu_kernel

    out_flat = pl.pallas_call(
        kernel,
        out_shape=jax.ShapeDtypeStruct((n, cout, hw), dtype),
        grid_spec=pltpu.PrefetchScalarGridSpec(
            num_scalar_prefetch=0,
            grid=grid,
            in_specs=[
                pl.BlockSpec((None, cin, thw), lambda i, b, j: (b, 0, i)),  # x
                pl.BlockSpec((tn, cin), lambda i, b, j: (j, 0)),            # weight
                pl.BlockSpec((tn, 1), lambda i, b, j: (j, 0)),              # bias
            ],
            out_specs=pl.BlockSpec((None, tn, thw), lambda i, b, j: (b, j, i)),
        ),
        compiler_params=pltpu.CompilerParams(
            dimension_semantics=("parallel", "parallel", "parallel"),
            vmem_limit_bytes=vmem_limit,
        ),
    )(x_flat, w_mat, b_col)

    return out_flat.reshape(n, cout, h, w)


def init_pointwise_conv_params(key, in_channels, out_channels, dtype=jnp.float32):
    """Deterministic init mimicking nn.Conv2d defaults (kaiming-uniform-ish)."""
    kw, kb = jax.random.split(key)
    fan_in = in_channels  # kernel_size = 1x1
    bound = 1.0 / jnp.sqrt(fan_in)
    weight = jax.random.uniform(
        kw, (out_channels, in_channels, 1, 1), dtype, minval=-bound, maxval=bound)
    bias = jax.random.uniform(
        kb, (out_channels,), dtype, minval=-bound, maxval=bound)
    return weight, bias


if __name__ == "__main__":
    key = jax.random.PRNGKey(0)
    k_x, k_p, k_x2, k_p2, k_x3, k_p3 = jax.random.split(key, 6)

    # Case 1: tiny channels (VPU path) — the module's test-scale shapes.
    N, C_IN, H, W = 2, 4, 16, 16
    C_OUT = 8
    x = jax.random.normal(k_x, (N, C_IN, H, W), dtype=jnp.float32)
    weight, bias = init_pointwise_conv_params(k_p, C_IN, C_OUT)

    out = jax.block_until_ready(pointwise_conv2d(x, weight, bias))
    ref = jnp.einsum("nchw,oc->nohw", x, weight.reshape(C_OUT, C_IN)) \
        + bias.reshape(1, C_OUT, 1, 1)
    assert out.shape == (N, C_OUT, H, W)
    assert jnp.allclose(out, ref, atol=1e-5, rtol=1e-5)

    # Case 2: wider channels (MXU path), single Cout tile.
    N2, C_IN2, H2, W2, C_OUT2 = 1, 32, 8, 16, 32
    x2 = jax.random.normal(k_x2, (N2, C_IN2, H2, W2), dtype=jnp.float32)
    w2, b2 = init_pointwise_conv_params(k_p2, C_IN2, C_OUT2)

    out2 = jax.block_until_ready(pointwise_conv2d(x2, w2, b2))
    ref2 = jnp.einsum("nchw,oc->nohw", x2, w2.reshape(C_OUT2, C_IN2)) \
        + b2.reshape(1, C_OUT2, 1, 1)
    assert out2.shape == (N2, C_OUT2, H2, W2)
    assert jnp.allclose(out2, ref2, atol=1e-4, rtol=1e-4)

    # Case 3: multiple Cout tiles (Cout=320 -> TN=256 + masked partial block);
    # exercises the reordered grid with the Cout axis innermost (x resident).
    N3, C_IN3, H3, W3, C_OUT3 = 1, 16, 8, 8, 320
    x3 = jax.random.normal(k_x3, (N3, C_IN3, H3, W3), dtype=jnp.float32)
    w3, b3 = init_pointwise_conv_params(k_p3, C_IN3, C_OUT3)

    out3 = jax.block_until_ready(pointwise_conv2d(x3, w3, b3))
    ref3 = jnp.einsum("nchw,oc->nohw", x3, w3.reshape(C_OUT3, C_IN3)) \
        + b3.reshape(1, C_OUT3, 1, 1)
    assert out3.shape == (N3, C_OUT3, H3, W3)
    assert jnp.allclose(out3, ref3, atol=1e-4, rtol=1e-4)

    print("KERNEL_OK")
</pallas_src>

<mosaic_0001>
module attributes {stable_mosaic.version = 11 : i64} {
  func.func @_pwconv_vpu_kernel(%arg0: i32, %arg1: i32, %arg2: i32, %arg3: memref<1x4x256xf32, #tpu.memory_space<vmem>>, %arg4: memref<8x4xf32, #tpu.memory_space<vmem>>, %arg5: memref<8x1xf32, #tpu.memory_space<vmem>>, %arg6: memref<1x8x256xf32, #tpu.memory_space<vmem>>) attributes {dimension_semantics = [#tpu.dimension_semantics<parallel>, #tpu.dimension_semantics<parallel>, #tpu.dimension_semantics<parallel>], iteration_bounds = array<i64: 1, 2, 1>, scalar_prefetch = 0 : i64, scratch_operands = 0 : i64, tpu.core_type = #tpu.core_type<tc>, window_params = [{transform_indices = @transform_0, window_bounds = array<i64: 1, 4, 256>}, {transform_indices = @transform_1, window_bounds = array<i64: 8, 4>}, {transform_indices = @transform_2, window_bounds = array<i64: 8, 1>}, {transform_indices = @transform_3, window_bounds = array<i64: 1, 8, 256>}]} {
    %c0 = arith.constant 0 : index
    %c0_0 = arith.constant 0 : index
    %c0_1 = arith.constant 0 : index
    %0 = vector.load %arg3[%c0, %c0_0, %c0_1] : memref<1x4x256xf32, #tpu.memory_space<vmem>>, vector<1x4x256xf32>
    %1 = vector.shape_cast %0 : vector<1x4x256xf32> to vector<4x256xf32>
    %c0_2 = arith.constant 0 : index
    %c0_3 = arith.constant 0 : index
    %2 = vector.load %arg4[%c0_2, %c0_3] : memref<8x4xf32, #tpu.memory_space<vmem>>, vector<8x4xf32>
    %c0_4 = arith.constant 0 : index
    %c0_5 = arith.constant 0 : index
    %3 = vector.load %arg5[%c0_4, %c0_5] : memref<8x1xf32, #tpu.memory_space<vmem>>, vector<8x1xf32>
    %4 = vector.shape_cast %3 : vector<8x1xf32> to vector<8x1xf32>
    %5 = vector.broadcast %4 : vector<8x1xf32> to vector<8x256xf32>
    %6 = vector.extract_strided_slice %2 {offsets = [0, 0], sizes = [8, 1], strides = [1, 1]} : vector<8x4xf32> to vector<8x1xf32>
    %7 = vector.extract_strided_slice %1 {offsets = [0, 0], sizes = [1, 256], strides = [1, 1]} : vector<4x256xf32> to vector<1x256xf32>
    %8 = vector.broadcast %6 : vector<8x1xf32> to vector<8x256xf32>
    %9 = vector.broadcast %7 : vector<1x256xf32> to vector<8x256xf32>
    %10 = arith.mulf %8, %9 : vector<8x256xf32>
    %11 = arith.addf %5, %10 : vector<8x256xf32>
    %12 = vector.extract_strided_slice %2 {offsets = [0, 1], sizes = [8, 1], strides = [1, 1]} : vector<8x4xf32> to vector<8x1xf32>
    %13 = vector.extract_strided_slice %1 {offsets = [1, 0], sizes = [1, 256], strides = [1, 1]} : vector<4x256xf32> to vector<1x256xf32>
    %14 = vector.broadcast %12 : vector<8x1xf32> to vector<8x256xf32>
    %15 = vector.broadcast %13 : vector<1x256xf32> to vector<8x256xf32>
    %16 = arith.mulf %14, %15 : vector<8x256xf32>
    %17 = arith.addf %11, %16 : vector<8x256xf32>
    %18 = vector.extract_strided_slice %2 {offsets = [0, 2], sizes = [8, 1], strides = [1, 1]} : vector<8x4xf32> to vector<8x1xf32>
    %19 = vector.extract_strided_slice %1 {offsets = [2, 0], sizes = [1, 256], strides = [1, 1]} : vector<4x256xf32> to vector<1x256xf32>
    %20 = vector.broadcast %18 : vector<8x1xf32> to vector<8x256xf32>
    %21 = vector.broadcast %19 : vector<1x256xf32> to vector<8x256xf32>
    %22 = arith.mulf %20, %21 : vector<8x256xf32>
    %23 = arith.addf %17, %22 : vector<8x256xf32>
    %24 = vector.extract_strided_slice %2 {offsets = [0, 3], sizes = [8, 1], strides = [1, 1]} : vector<8x4xf32> to vector<8x1xf32>
    %25 = vector.extract_strided_slice %1 {offsets = [3, 0], sizes = [1, 256], strides = [1, 1]} : vector<4x256xf32> to vector<1x256xf32>
    %26 = vector.broadcast %24 : vector<8x1xf32> to vector<8x256xf32>
    %27 = vector.broadcast %25 : vector<1x256xf32> to vector<8x256xf32>
    %28 = arith.mulf %26, %27 : vector<8x256xf32>
    %29 = arith.addf %23, %28 : vector<8x256xf32>
    %c0_6 = arith.constant 0 : index
    %c0_7 = arith.constant 0 : index
    %c0_8 = arith.constant 0 : index
    %30 = vector.load %arg6[%c0_6, %c0_7, %c0_8] : memref<1x8x256xf32, #tpu.memory_space<vmem>>, vector<1x8x256xf32>
    %31 = vector.shape_cast %30 : vector<1x8x256xf32> to vector<8x256xf32>
    %32 = vector.shape_cast %29 : vector<8x256xf32> to vector<1x8x256xf32>
    tpu.vector_store %arg6[%c0_6, %c0_7, %c0_8], %32 {strides = array<i32>} : memref<1x8x256xf32, #tpu.memory_space<vmem>>, vector<1x8x256xf32>,
    return
  }
  func.func @transform_0(%arg0: i32, %arg1: i32, %arg2: i32) -> (i32, i32, i32) {
    %c0_i32 = arith.constant 0 : i32
    %c0_i32_0 = arith.constant 0 : i32
    return %arg1, %c0_i32, %arg0 : i32, i32, i32
  }
  func.func @transform_1(%arg0: i32, %arg1: i32, %arg2: i32) -> (i32, i32) {
    %c0_i32 = arith.constant 0 : i32
    %c0_i32_0 = arith.constant 0 : i32
    return %arg2, %c0_i32 : i32, i32
  }
  func.func @transform_2(%arg0: i32, %arg1: i32, %arg2: i32) -> (i32, i32) {
    %c0_i32 = arith.constant 0 : i32
    %c0_i32_0 = arith.constant 0 : i32
    return %arg2, %c0_i32 : i32, i32
  }
  func.func @transform_3(%arg0: i32, %arg1: i32, %arg2: i32) -> (i32, i32, i32) {
    %c0_i32 = arith.constant 0 : i32
    return %arg1, %arg2, %arg0 : i32, i32, i32
  }
}

</mosaic_0001>

<llo_original>
// kernel: tpu_custom_call.1
$region0: #{tpu_custom_call.1}
  #allocation0 [shape = 'u32[]', space=smem, size = 0x4, offset = 0x4, fixed_abs, tag = 'smem constant byte address 0x4 - core index']
  #allocation1 [shape = 'u32[144,128]{1,0:T(1,128)}', space=vmem, size = 0x12000, scoped, tag = 'internal scratch']
  %s0 = inlined_call_operand.vmem [shape: f32[2,4,256], index: 0, kind: input, shape index: {}]
  %s1 = inlined_call_operand.vmem [shape: f32[8,4], index: 1, kind: input, shape index: {}]
  %s2 = inlined_call_operand.vmem [shape: f32[8,1], index: 2, kind: input, shape index: {}]
  %s3 = inlined_call_operand.hbm [shape: f32[2,8,256], index: 3, kind: output, shape index: {}]
  %s4 = sld [smem:[#allocation0]]
  $region45: #{tpu_custom_call.1} parent=0
    _
  %s6 = ssub.s32 1, %s4
  %s7 = scalar_select 0, %s6, %s4
  $region1: #{tpu_custom_call.1} parent=0
    #allocation2 [shape = 'u8[16384]{0}', space=vmem, size = 0x4000, scoped, tag = 'output window, operand 0']
    #allocation3 [shape = 's32[2]{0}', space=sflag, size = 0x8, scoped, tag = 'scoped memory for tpu_custom_call.1']
    %8 = vsyncpa [#allocation3], 0
    %s9 = scalar_lea.sflag [#allocation3], 1
    %10 = vsyncpa %s9, 0
    loop: start=0, step=1, limit=4
    $region2: #{tpu_custom_call.1} parent=1 // loop_pre_header
      _
    $region3: #{tpu_custom_call.1} parent=1 // loop_header
      %s12 = sphi 0, %s16
      %p13 = scmp.ge.s32.totalorder %s12, 4
      %s19 = sphi 0, %s38
      %s20 = sphi 0, %s34
      %s21 = sphi 0, %s30
      %s22 = sphi 0, %s19
      %s23 = sphi 0, %s20
      %s24 = sphi 0, %s21
      %s25 = sphi 0, %s22
      %s26 = sphi 0, %s23
      %s27 = sphi 0, %s24
      %s43 = sphi 0, %s45
      %s46 = sphi 0, %s43
      %s47 = sphi 0, %s46
      %s63 = sphi 0, %s47
      %s69 = sphi 0, %s71
      %s72 = sphi 0, %s69
      %s73 = sphi 0, %s72
      %s89 = sphi 0, %s73
      %s95 = sphi 0, %s97
      %s98 = sphi 0, %s95
      %s99 = sphi 0, %s98
      %s115 = sphi 0, %s99
      %s125 = sphi 0, %s127
      %s128 = sphi 0, %s125
      %s129 = sphi 0, %s128
      %s145 = sphi 0, %s129
    $region4: #{tpu_custom_call.1} parent=1 // loop_header_branch
      %15 = sbr.rel (%p13) target = $region8
    $region5: #{tpu_custom_call.1} parent=1 // loop_body
      %s17 = ssub.s32 %s12, 1
      %s18 = ssub.s32 %s12, 2
      %s28 = sadd.s32 1, %s21
      %p29 = scmp.ge.s32.totalorder %s28, 1
      %s30 = scalar_select %p29, 0, %s28
      %s31 = sadd.s32 1, %s20
      %s32 = scalar_select %p29, %s31, %s20
      %p33 = scmp.ge.s32.totalorder %s32, 2
      %s34 = scalar_select %p33, 0, %s32
      %s35 = sadd.s32 1, %s19
      %s36 = scalar_select %p33, %s35, %s19
      %p37 = scmp.ge.s32.totalorder %s36, 1
      %s38 = scalar_select %p37, 0, %s36
      %s39 = ssub.s32 %s20, %s34
      %s40 = ssub.s32 %s19, %s38
      %s41 = sor.u32 %s39, %s40
      %p42 = scmp.eq.s32.totalorder %s41, 0
      %s44 = sadd.s32 %s43, 1
      %s45 = scalar_select %p42, %s43, %s44
      %p48 = pneg %p42
      %p49 = scmp.eq.s32.totalorder %s12, 1
      %p50 = por %p48, %p49
      %p51 = scmp.ne.s32.totalorder %s43, %s46
      %p52 = scmp.eq.s32.totalorder %s12, 0
      %p53 = por %p51, %p52
      %p54 = scmp.ne.s32.totalorder %s43, %s46
      %p55 = scmp.eq.s32.totalorder %s17, 1
      %p56 = por %p54, %p55
      %p57 = scmp.ne.s32.totalorder %s46, %s47
      %p58 = scmp.eq.s32.totalorder %s17, 0
      %p59 = por %p57, %p58
      %p60 = scmp.ne.s32.totalorder %s46, %s47
      %p61 = scmp.eq.s32.totalorder %s18, 1
      %p62 = por %p60, %p61
      %p64 = scmp.ne.s32.totalorder %s47, %s63
      %p65 = scmp.eq.s32.totalorder %s18, 0
      %p66 = por %p64, %p65
      %s67 = ssub.s32 %s21, %s30
      %p68 = scmp.eq.s32.totalorder %s67, 0
      %s70 = sadd.s32 %s69, 1
      %s71 = scalar_select %p68, %s69, %s70
      %p74 = pneg %p68
      %p75 = scmp.eq.s32.totalorder %s12, 1
      %p76 = por %p74, %p75
      %p77 = scmp.ne.s32.totalorder %s69, %s72
      %p78 = scmp.eq.s32.totalorder %s12, 0
      %p79 = por %p77, %p78
      %p80 = scmp.ne.s32.totalorder %s69, %s72
      %p81 = scmp.eq.s32.totalorder %s17, 1
      %p82 = por %p80, %p81
      %p83 = scmp.ne.s32.totalorder %s72, %s73
      %p84 = scmp.eq.s32.totalorder %s17, 0
      %p85 = por %p83, %p84
      %p86 = scmp.ne.s32.totalorder %s72, %s73
      %p87 = scmp.eq.s32.totalorder %s18, 1
      %p88 = por %p86, %p87
      %p90 = scmp.ne.s32.totalorder %s73, %s89
      %p91 = scmp.eq.s32.totalorder %s18, 0
      %p92 = por %p90, %p91
      %s93 = ssub.s32 %s21, %s30
      %p94 = scmp.eq.s32.totalorder %s93, 0
      %s96 = sadd.s32 %s95, 1
      %s97 = scalar_select %p94, %s95, %s96
      %p100 = pneg %p94
      %p101 = scmp.eq.s32.totalorder %s12, 1
      %p102 = por %p100, %p101
      %p103 = scmp.ne.s32.totalorder %s95, %s98
      %p104 = scmp.eq.s32.totalorder %s12, 0
      %p105 = por %p103, %p104
      %p106 = scmp.ne.s32.totalorder %s95, %s98
      %p107 = scmp.eq.s32.totalorder %s17, 1
      %p108 = por %p106, %p107
      %p109 = scmp.ne.s32.totalorder %s98, %s99
      %p110 = scmp.eq.s32.totalorder %s17, 0
      %p111 = por %p109, %p110
      %p112 = scmp.ne.s32.totalorder %s98, %s99
      %p113 = scmp.eq.s32.totalorder %s18, 1
      %p114 = por %p112, %p113
      %p116 = scmp.ne.s32.totalorder %s99, %s115
      %p117 = scmp.eq.s32.totalorder %s18, 0
      %p118 = por %p116, %p117
      %s119 = ssub.s32 %s20, %s34
      %s120 = ssub.s32 %s21, %s30
      %s121 = sor.u32 %s119, %s120
      %s122 = ssub.s32 %s19, %s38
      %s123 = sor.u32 %s121, %s122
      %p124 = scmp.eq.s32.totalorder %s123, 0
      %s126 = sadd.s32 %s125, 1
      %s127 = scalar_select %p124, %s125, %s126
      %p130 = pneg %p124
      %p131 = scmp.eq.s32.totalorder %s12, 1
      %p132 = por %p130, %p131
      %p133 = scmp.ne.s32.totalorder %s125, %s128
      %p134 = scmp.eq.s32.totalorder %s12, 0
      %p135 = por %p133, %p134
      %p136 = scmp.ne.s32.totalorder %s125, %s128
      %p137 = scmp.eq.s32.totalorder %s17, 1
      %p138 = por %p136, %p137
      %p139 = scmp.ne.s32.totalorder %s128, %s129
      %p140 = scmp.eq.s32.totalorder %s17, 0
      %p141 = por %p139, %p140
      %p142 = scmp.ne.s32.totalorder %s128, %s129
      %p143 = scmp.eq.s32.totalorder %s18, 1
      %p144 = por %p142, %p143
      %p146 = scmp.ne.s32.totalorder %s129, %s145
      %p147 = scmp.eq.s32.totalorder %s18, 0
      %p148 = por %p146, %p147
      %p149 = scmp.le.s32.totalorder 1, %s12
      %p150 = scmp.lt.s32.totalorder %s12, 3
      %p151 = pnand %p149, %p150
      %p152 = pneg %p151
      // Predicated region
      $region9: #{tpu_custom_call.1} parent=5 // pred_check
        _
      $region10: #{tpu_custom_call.1} parent=5 // pred_check_branch
        %154 = sbr.rel (%p151) target = $region12
      $region11: #{tpu_custom_call.1} parent=5 // pred_region
        %s155 = ssub.s32 %s12, 1
        // Predicated region
        $region13: #{tpu_custom_call.1} parent=11 // pred_check
          %p156 = pneg %p85
        $region14: #{tpu_custom_call.1} parent=11 // pred_check_branch
          %158 = sbr.rel (%p156) target = $region16
        $region15: #{tpu_custom_call.1} parent=11 // pred_region
          %p159 = scmp.lt.s32.totalorder %s24, 0
          %s160 = scalar_select %p159, %s24, 0
          %s161 = smul.addr %s160, 8
          %s162 = scalar_lea.vmem %s1, %s161
        $region16: #{tpu_custom_call.1} parent=11 // pred_fallthru
          _
        // Predicated region
        $region17: #{tpu_custom_call.1} parent=11 // pred_check
          %p163 = pneg %p111
        $region18: #{tpu_custom_call.1} parent=11 // pred_check_branch
          %165 = sbr.rel (%p163) target = $region20
        $region19: #{tpu_custom_call.1} parent=11 // pred_region
          %p166 = scmp.lt.s32.totalorder %s24, 0
          %s167 = scalar_select %p166, %s24, 0
          %s168 = smul.addr %s167, 8
          %s169 = scalar_lea.vmem %s2, %s168
        $region20: #{tpu_custom_call.1} parent=11 // pred_fallthru
          _
      $region12: #{tpu_custom_call.1} parent=5 // pred_fallthru
        _
      %p170 = scmp.lt.s32.totalorder %s12, 2
      // Predicated region
      $region21: #{tpu_custom_call.1} parent=5 // pred_check
        %p171 = pneg %p170
      $region22: #{tpu_custom_call.1} parent=5 // pred_check_branch
        %173 = sbr.rel (%p171) target = $region24
      $region23: #{tpu_custom_call.1} parent=5 // pred_region
        // Predicated region
        $region25: #{tpu_custom_call.1} parent=23 // pred_check
          %p174 = pneg %p53
        $region26: #{tpu_custom_call.1} parent=23 // pred_check_branch
          %176 = sbr.rel (%p174) target = $region28
        $region27: #{tpu_custom_call.1} parent=23 // pred_region
          %s177 = smul.u32 2, %s19
          %p178 = scmp.lt.s32.totalorder %s20, 1
          %s179 = scalar_select %p178, %s20, 1
          %p180 = scmp.lt.s32.totalorder %s177, 1
          %s181 = scalar_select %p180, %s177, 1
          %s182 = smul.addr %s179, 2
          %s183 = sadd.s32 %s181, %s182
          %s184 = smul.addr %s183, 4
          %s185 = scalar_lea.vmem %s0, %s184
          %s186 = smul.u32 2, %s19
        $region28: #{tpu_custom_call.1} parent=23 // pred_fallthru
          _
      $region24: #{tpu_custom_call.1} parent=5 // pred_fallthru
        _
      %p187 = scmp.le.s32.totalorder 1, %s12
      %p188 = scmp.lt.s32.totalorder %s12, 3
      %p189 = pnand %p187, %p188
      %p190 = pneg %p189
      // Predicated region
      $region29: #{tpu_custom_call.1} parent=5 // pred_check
        _
      $region30: #{tpu_custom_call.1} parent=5 // pred_check_branch
        %192 = sbr.rel (%p189) target = $region32
      $region31: #{tpu_custom_call.1} parent=5 // pred_region
        %s193 = ssub.s32 %s12, 1
        %s194 = smul.u32 2, %s22
        %p195 = scmp.lt.s32.totalorder %s23, 1
        %s196 = scalar_select %p195, %s23, 1
        %p197 = scmp.lt.s32.totalorder %s194, 1
        %s198 = scalar_select %p197, %s194, 1
        %s199 = smul.addr %s196, 2
        %s200 = sadd.s32 %s198, %s199
        %s201 = smul.addr %s200, 4
        %s202 = scalar_lea.vmem %s0, %s201
        %p203 = pneg %p59
        %p204 = pneg %p56
        %p205 = scmp.lt.s32.totalorder %s24, 0
        %s206 = scalar_select %p205, %s24, 0
        %s207 = smul.addr %s206, 8
        %s208 = scalar_lea.vmem %s1, %s207
        %p209 = pneg %p85
        %p210 = pneg %p82
        %p211 = scmp.lt.s32.totalorder %s24, 0
        %s212 = scalar_select %p211, %s24, 0
        %s213 = smul.addr %s212, 8
        %s214 = scalar_lea.vmem %s2, %s213
        %p215 = pneg %p111
        %p216 = pneg %p108
        %p217 = pneg %p141
        %p218 = pneg %p138
        %s219 = sand.u32 %s128, 1
        %s220 = scalar_lea.sflag [#allocation3], %s219
        %s221 = sand.u32 %s128, 1
        %s222 = smul.addr %s221, 16
        %s223 = scalar_lea.vmem [#allocation2], %s222
        %s224 = smul.u32 2, %s22
        %p225 = scmp.lt.s32.totalorder %s23, 1
        %s226 = scalar_select %p225, %s23, 1
        %p227 = scmp.lt.s32.totalorder %s224, 1
        %s228 = scalar_select %p227, %s224, 1
        %s229 = smul.addr %s226, 2
        %s230 = sadd.s32 %s228, %s229
        %s231 = smul.addr %s230, 4
        %s232 = scalar_lea.vmem %s0, %s231
        %s233 = smul.u32 2, %s22
        %p234 = scmp.lt.s32.totalorder %s24, 0
        %s235 = scalar_select %p234, %s24, 0
        %s236 = smul.addr %s235, 8
        %s237 = scalar_lea.vmem %s1, %s236
        %p238 = scmp.lt.s32.totalorder %s24, 0
        %s239 = scalar_select %p238, %s24, 0
        %s240 = smul.addr %s239, 8
        %s241 = scalar_lea.vmem %s2, %s240
        %s242 = smul.u32 2, %s22
        %v243 = vld [vmem:[%s232] sm:$0xff]
        %v244 = vld [vmem:[%s237] sm:$0xff]
        %v245 = vld [vmem:[%s241] sm:$0xff]
        %247 = vset.pattern.permute.xlu0 0
        %248 = vperm.xlu0 %247, %v245
        %v249 = vpop.permute.xlu0 %248
        %252 = vset.pattern.permute.xlu0 0
        %253 = vperm.xlu0 %252, %v244
        %v254 = vpop.permute.xlu0 %253
        %v257 = vlaneseq
        %v258 = vshrl.u32 %v257, 7
        %v259 = vsub.s32 0, %v258
        %v260 = vrot.slane %v243, %v259
        %v261 = vlaneseq
        %v262 = vshrl.u32 %v261, 7
        %v263 = vsub.s32 4, %v262
        %v264 = vrot.slane %v243, %v263
        %v267 = vlaneseq
        %v268 = vshrl.u32 %v267, 7
        %v269 = vsub.s32 0, %v268
        %v270 = vrot.slane %v260, %v269
        %v271 = vlaneseq
        %v272 = vshrl.u32 %v271, 7
        %v273 = vsub.s32 0, %v272
        %v274 = vrot.slane %v264, %v273
        %v275 = vmul.f32 %v254, %v270
        %v276 = vmul.f32 %v254, %v274
        %v277 = vadd.f32 %v249, %v275
        %v278 = vadd.f32 %v249, %v276
        %279 = vset.pattern.permute.xlu0 1
        %280 = vperm.xlu0 %279, %v244
        %v281 = vpop.permute.xlu0 %280
        %v283 = vlaneseq
        %v284 = vshrl.u32 %v283, 7
        %v285 = vsub.s32 1, %v284
        %v286 = vrot.slane %v243, %v285
        %v287 = vlaneseq
        %v288 = vshrl.u32 %v287, 7
        %v289 = vsub.s32 5, %v288
        %v290 = vrot.slane %v243, %v289
        %v293 = vlaneseq
        %v294 = vshrl.u32 %v293, 7
        %v295 = vsub.s32 1, %v294
        %v296 = vrot.slane %v286, %v295
        %v297 = vlaneseq
        %v298 = vshrl.u32 %v297, 7
        %v299 = vsub.s32 1, %v298
        %v300 = vrot.slane %v290, %v299
        %v301 = vmul.f32 %v281, %v296
        %v302 = vmul.f32 %v281, %v300
        %v303 = vadd.f32 %v277, %v301
        %v304 = vadd.f32 %v278, %v302
        %305 = vset.pattern.permute.xlu0 2
        %306 = vperm.xlu0 %305, %v244
        %v307 = vpop.permute.xlu0 %306
        %v309 = vlaneseq
        %v310 = vshrl.u32 %v309, 7
        %v311 = vsub.s32 2, %v310
        %v312 = vrot.slane %v243, %v311
        %v313 = vlaneseq
        %v314 = vshrl.u32 %v313, 7
        %v315 = vsub.s32 6, %v314
        %v316 = vrot.slane %v243, %v315
        %v319 = vlaneseq
        %v320 = vshrl.u32 %v319, 7
        %v321 = vsub.s32 2, %v320
        %v322 = vrot.slane %v312, %v321
        %v323 = vlaneseq
        %v324 = vshrl.u32 %v323, 7
        %v325 = vsub.s32 2, %v324
        %v326 = vrot.slane %v316, %v325
        %v327 = vmul.f32 %v307, %v322
        %v328 = vmul.f32 %v307, %v326
        %v329 = vadd.f32 %v303, %v327
        %v330 = vadd.f32 %v304, %v328
        %331 = vset.pattern.permute.xlu0 3
        %332 = vperm.xlu0 %331, %v244
        %v333 = vpop.permute.xlu0 %332
        %v335 = vlaneseq
        %v336 = vshrl.u32 %v335, 7
        %v337 = vsub.s32 3, %v336
        %v338 = vrot.slane %v243, %v337
        %v339 = vlaneseq
        %v340 = vshrl.u32 %v339, 7
        %v341 = vsub.s32 7, %v340
        %v342 = vrot.slane %v243, %v341
        %v345 = vlaneseq
        %v346 = vshrl.u32 %v345, 7
        %v347 = vsub.s32 3, %v346
        %v348 = vrot.slane %v338, %v347
        %v349 = vlaneseq
        %v350 = vshrl.u32 %v349, 7
        %v351 = vsub.s32 3, %v350
        %v352 = vrot.slane %v342, %v351
        %v353 = vmul.f32 %v333, %v348
        %v354 = vmul.f32 %v333, %v352
        %v355 = vadd.f32 %v329, %v353
        %v356 = vadd.f32 %v330, %v354
        %357 = vst [vmem:[%s223] sm:$0xff] %v355
        %358 = vst [vmem:[%s223 + $0x8] sm:$0xff] %v356
        %s359 = sand.u32 %s128, 1
        %s360 = scalar_lea.sflag [#allocation3], %s359
        %s361 = sand.u32 %s128, 1
        %s362 = smul.addr %s361, 16
        %s363 = scalar_lea.vmem [#allocation2], %s362
        // Predicated region
        $region33: #{tpu_custom_call.1} parent=31 // pred_check
          %p364 = pneg %p138
        $region34: #{tpu_custom_call.1} parent=31 // pred_check_branch
          %366 = sbr.rel (%p364) target = $region36
        $region35: #{tpu_custom_call.1} parent=31 // pred_region
          %s367 = smul.u32 2, %s22
          %s369 = ssub.s32 256, 256
          %370 = vsyncadd %s360, %s369
          %s371 = smul.addr %s24, 2
          %s372 = sadd.s32 %s367, %s371
          %s373 = smul.addr %s23, 2
          %s374 = sadd.s32 %s372, %s373
          %s375 = smul.addr %s374, 128
          %s376 = scalar_lea.hbm %s3, %s375
          %s378 = sshll.u32 %s363, 4
          %s379 = int_to_ptr.vmem [resolvable:$true] %s378
          %381 = dma.vmem_to_hbm [thread:$0]  %s379, 256, %s376, %s360
        $region36: #{tpu_custom_call.1} parent=31 // pred_fallthru
          _
      $region32: #{tpu_custom_call.1} parent=5 // pred_fallthru
        _
      %p382 = scmp.le.s32.totalorder 2, %s12
      // Predicated region
      $region37: #{tpu_custom_call.1} parent=5 // pred_check
        %p383 = pneg %p382
      $region38: #{tpu_custom_call.1} parent=5 // pred_check_branch
        %385 = sbr.rel (%p383) target = $region40
      $region39: #{tpu_custom_call.1} parent=5 // pred_region
        %s386 = ssub.s32 %s12, 2
        // Predicated region
        $region41: #{tpu_custom_call.1} parent=39 // pred_check
          %p387 = pneg %p144
        $region42: #{tpu_custom_call.1} parent=39 // pred_check_branch
          %389 = sbr.rel (%p387) target = $region44
        $region43: #{tpu_custom_call.1} parent=39 // pred_region
          %s390 = sand.u32 %s129, 1
          %s391 = scalar_lea.sflag [#allocation3], %s390
          %s392 = sand.u32 %s129, 1
          %s393 = smul.addr %s392, 16
          %s394 = scalar_lea.vmem [#allocation2], %s393
          %395 = dma.done %s391, 256
        $region44: #{tpu_custom_call.1} parent=39 // pred_fallthru
          _
      $region40: #{tpu_custom_call.1} parent=5 // pred_fallthru
        _
    $region6: #{tpu_custom_call.1} parent=1 // loop_footer
      %s16 = sadd.s32 1, %s12
    $region7: #{tpu_custom_call.1} parent=1 // loop_footer_branch
      %11 = sbr.rel target = $region3
    $region8: #{tpu_custom_call.1} parent=1 // loop_exit
      _
    %396 = vsyncpa [#allocation3], 1
    %s397 = scalar_lea.sflag [#allocation3], 1
    %398 = vsyncpa %s397, 1

</llo_original>
